<compile_context>
chip_gen: v7x
topology: tpu7x:2x2x1
jax: 0.10.0
libtpu: 0.0.40
codegen_flags: <defaults>
</compile_context>

<pallas_src>
import jax
import jax.numpy as jnp
from jax.experimental import pallas as pl
from jax.experimental.pallas import tpu as pltpu


def _copy_kernel(x_ref, o_ref):
    # x_ref: (Bt, 1, c_per_group, HW_pad) -- one contiguous input channel group
    # o_ref: (Bt, c_per_group, HW_pad)    -- matching strided slab of the output
    # The permutation itself lives in the BlockSpec index maps / wrapper
    # reshapes, so the body is a single unmasked, lane-dense block copy.
    o_ref[...] = x_ref[:, 0, :, :]


def channel_shuffle(x, groups=3):
    """Pallas TPU implementation of PyTorch channel_shuffle on NCHW input."""
    B, C, H, W = x.shape
    assert C % groups == 0
    cpg = C // groups
    HW = H * W

    # Lane-dense spatial axis: pad H*W up to a multiple of 128 so every
    # vector load/store is a full 128-lane access (real shapes: 49/196/784...).
    HW_pad = ((HW + 127) // 128) * 128
    x3 = x.reshape(B, C, HW)  # free row-major merge of H, W
    if HW_pad != HW:
        # TODO(synk): for very large tensors, tile the lane dim with a masked
        # tail step instead of padding to avoid this extra HBM pass.
        x3 = jnp.pad(x3, ((0, 0), (0, 0), (0, HW_pad - HW)))

    # Free reshapes so the whole shuffle is expressible with contiguous /
    # lane-aligned blocks:
    #   input : (B, groups, cpg, HW_pad)   -- block = one whole channel group
    #   output: (B, cpg, groups*HW_pad)    -- out channel cp*groups+gi lives at
    #                                         row cp, columns [gi*HW_pad, +HW_pad)
    x4 = x3.reshape(B, groups, cpg, HW_pad)

    # Fold several batch images into one grid step: mem-bound kernel, so per-step
    # DMA size is the #1 lever (~0.35us fixed overhead per grid step).
    itemsize = jnp.dtype(x.dtype).itemsize
    target_bytes = 2 * 1024 * 1024
    bt = 1
    for cand in range(B, 0, -1):
        if B % cand == 0 and cand * cpg * HW_pad * itemsize <= target_bytes:
            bt = cand
            break

    y3 = pl.pallas_call(
        _copy_kernel,
        out_shape=jax.ShapeDtypeStruct((B, cpg, groups * HW_pad), x.dtype),
        grid=(B // bt, groups),
        in_specs=[
            pl.BlockSpec((bt, 1, cpg, HW_pad), lambda b, g: (b, g, 0, 0)),
        ],
        out_specs=pl.BlockSpec((bt, cpg, HW_pad), lambda b, g: (b, 0, g)),
        compiler_params=pltpu.CompilerParams(
            dimension_semantics=("parallel", "parallel")),
    )(x4)

    # Undo the output view: (B, cpg, groups, HW_pad) -> drop pad -> (B, C, H, W).
    y = y3.reshape(B, cpg, groups, HW_pad)[..., :HW].reshape(B, C, H, W)
    return y


def _reference(x, groups):
    B, C, H, W = x.shape
    return jnp.transpose(
        x.reshape(B, groups, C // groups, H, W), (0, 2, 1, 3, 4)
    ).reshape(B, C, H, W)


if __name__ == "__main__":
    groups = 3
    key = jax.random.PRNGKey(0)

    # Main check: lane-dense spatial size (H*W = 256).
    B, C, H, W = 2, 12, 16, 16
    x = jax.random.normal(key, (B, C, H, W), jnp.float32)
    fwd = jax.jit(lambda t: channel_shuffle(t, groups=groups))
    out = fwd(x)
    jax.block_until_ready(out)
    assert out.shape == (B, C, H, W)
    assert out.dtype == x.dtype
    assert bool(jnp.all(out == _reference(x, groups)))

    # Secondary check: non-multiple-of-128 spatial size exercises the pad path.
    B2, C2, H2, W2 = 2, 6, 7, 7
    x2 = jax.random.normal(jax.random.PRNGKey(1), (B2, C2, H2, W2), jnp.float32)
    out2 = jax.jit(lambda t: channel_shuffle(t, groups=groups))(x2)
    jax.block_until_ready(out2)
    assert bool(jnp.all(out2 == _reference(x2, groups)))

    print("KERNEL_OK")
</pallas_src>

<mosaic_0001>
module attributes {stable_mosaic.version = 11 : i64} {
  func.func @_copy_kernel(%arg0: i32, %arg1: i32, %arg2: memref<2x1x4x256xf32, #tpu.memory_space<vmem>>, %arg3: memref<2x4x256xf32, #tpu.memory_space<vmem>>) attributes {dimension_semantics = [#tpu.dimension_semantics<parallel>, #tpu.dimension_semantics<parallel>], iteration_bounds = array<i64: 1, 3>, scalar_prefetch = 0 : i64, scratch_operands = 0 : i64, tpu.core_type = #tpu.core_type<tc>, window_params = [{transform_indices = @transform_0, window_bounds = array<i64: 2, 1, 4, 256>}, {transform_indices = @transform_1, window_bounds = array<i64: 2, 4, 256>}]} {
    %c0 = arith.constant 0 : index
    %c0_0 = arith.constant 0 : index
    %c0_1 = arith.constant 0 : index
    %c0_2 = arith.constant 0 : index
    %0 = vector.load %arg2[%c0, %c0_0, %c0_1, %c0_2] : memref<2x1x4x256xf32, #tpu.memory_space<vmem>>, vector<2x1x4x256xf32>
    %1 = vector.shape_cast %0 : vector<2x1x4x256xf32> to vector<2x4x256xf32>
    %c0_3 = arith.constant 0 : index
    %c0_4 = arith.constant 0 : index
    %c0_5 = arith.constant 0 : index
    %2 = vector.load %arg3[%c0_3, %c0_4, %c0_5] : memref<2x4x256xf32, #tpu.memory_space<vmem>>, vector<2x4x256xf32>
    tpu.vector_store %arg3[%c0_3, %c0_4, %c0_5], %1 {strides = array<i32>} : memref<2x4x256xf32, #tpu.memory_space<vmem>>, vector<2x4x256xf32>,
    return
  }
  func.func @transform_0(%arg0: i32, %arg1: i32) -> (i32, i32, i32, i32) {
    %c0_i32 = arith.constant 0 : i32
    %c0_i32_0 = arith.constant 0 : i32
    %c0_i32_1 = arith.constant 0 : i32
    return %arg0, %arg1, %c0_i32, %c0_i32_0 : i32, i32, i32, i32
  }
  func.func @transform_1(%arg0: i32, %arg1: i32) -> (i32, i32, i32) {
    %c0_i32 = arith.constant 0 : i32
    %c0_i32_0 = arith.constant 0 : i32
    return %arg0, %c0_i32, %arg1 : i32, i32, i32
  }
}

</mosaic_0001>

<llo_original>
// kernel: _lambda_.1
$region0: #{_lambda_.1}
  #allocation0 [shape = 'u32[]', space=smem, size = 0x4, offset = 0x4, fixed_abs, tag = 'smem constant byte address 0x4 - core index']
  #allocation1 [shape = 'u32[144,128]{1,0:T(1,128)}', space=vmem, size = 0x12000, scoped, tag = 'internal scratch']
  %s0 = inlined_call_operand.vmem [shape: f32[2,3,4,256], index: 0, kind: input, shape index: {}]
  %s1 = inlined_call_operand.vmem [shape: f32[2,4,768], index: 1, kind: output, shape index: {}]
  %s2 = sld [smem:[#allocation0]]
  $region109: #{_lambda_.1} parent=0
    _
  %s4 = ssub.s32 1, %s2
  %s5 = scalar_select 0, %s4, %s2
  $region1: #{_lambda_.1} parent=0
    #allocation2 [shape = 'u8[16384]{0}', space=vmem, size = 0x4000, scoped, tag = 'input window, operand 0']
    #allocation3 [shape = 'u8[16384]{0}', space=vmem, size = 0x4000, scoped, tag = 'output window, operand 0']
    loop: start=0, step=1, limit=5
    $region2: #{_lambda_.1} parent=1 // loop_pre_header
      _
    $region3: #{_lambda_.1} parent=1 // loop_header
      %s7 = sphi 0, %s11
      %p8 = scmp.ge.s32.totalorder %s7, 5
      %s14 = sphi 0, %s26
      %s15 = sphi 0, %s22
      %s16 = sphi 0, %s14
      %s17 = sphi 0, %s15
      %s18 = sphi 0, %s16
      %s19 = sphi 0, %s17
      %s31 = sphi 0, %s33
      %s34 = sphi 0, %s31
      %s35 = sphi 0, %s34
      %s51 = sphi 0, %s35
      %s59 = sphi 0, %s61
      %s62 = sphi 0, %s59
      %s63 = sphi 0, %s62
      %s79 = sphi 0, %s63
    $region4: #{_lambda_.1} parent=1 // loop_header_branch
      %10 = sbr.rel (%p8) target = $region8
    $region5: #{_lambda_.1} parent=1 // loop_body
      %s12 = ssub.s32 %s7, 1
      %s13 = ssub.s32 %s7, 2
      %s20 = sadd.s32 1, %s15
      %p21 = scmp.ge.s32.totalorder %s20, 3
      %s22 = scalar_select %p21, 0, %s20
      %s23 = sadd.s32 1, %s14
      %s24 = scalar_select %p21, %s23, %s14
      %p25 = scmp.ge.s32.totalorder %s24, 1
      %s26 = scalar_select %p25, 0, %s24
      %s27 = ssub.s32 %s14, %s26
      %s28 = ssub.s32 %s15, %s22
      %s29 = sor.u32 %s27, %s28
      %p30 = scmp.eq.s32.totalorder %s29, 0
      %s32 = sadd.s32 %s31, 1
      %s33 = scalar_select %p30, %s31, %s32
      %p36 = pneg %p30
      %p37 = scmp.eq.s32.totalorder %s7, 2
      %p38 = por %p36, %p37
      %p39 = scmp.ne.s32.totalorder %s31, %s34
      %p40 = scmp.eq.s32.totalorder %s7, 0
      %p41 = por %p39, %p40
      %p42 = scmp.ne.s32.totalorder %s31, %s34
      %p43 = scmp.eq.s32.totalorder %s12, 2
      %p44 = por %p42, %p43
      %p45 = scmp.ne.s32.totalorder %s34, %s35
      %p46 = scmp.eq.s32.totalorder %s12, 0
      %p47 = por %p45, %p46
      %p48 = scmp.ne.s32.totalorder %s34, %s35
      %p49 = scmp.eq.s32.totalorder %s13, 2
      %p50 = por %p48, %p49
      %p52 = scmp.ne.s32.totalorder %s35, %s51
      %p53 = scmp.eq.s32.totalorder %s13, 0
      %p54 = por %p52, %p53
      %s55 = ssub.s32 %s14, %s26
      %s56 = ssub.s32 %s15, %s22
      %s57 = sor.u32 %s55, %s56
      %p58 = scmp.eq.s32.totalorder %s57, 0
      %s60 = sadd.s32 %s59, 1
      %s61 = scalar_select %p58, %s59, %s60
      %p64 = pneg %p58
      %p65 = scmp.eq.s32.totalorder %s7, 2
      %p66 = por %p64, %p65
      %p67 = scmp.ne.s32.totalorder %s59, %s62
      %p68 = scmp.eq.s32.totalorder %s7, 0
      %p69 = por %p67, %p68
      %p70 = scmp.ne.s32.totalorder %s59, %s62
      %p71 = scmp.eq.s32.totalorder %s12, 2
      %p72 = por %p70, %p71
      %p73 = scmp.ne.s32.totalorder %s62, %s63
      %p74 = scmp.eq.s32.totalorder %s12, 0
      %p75 = por %p73, %p74
      %p76 = scmp.ne.s32.totalorder %s62, %s63
      %p77 = scmp.eq.s32.totalorder %s13, 2
      %p78 = por %p76, %p77
      %p80 = scmp.ne.s32.totalorder %s63, %s79
      %p81 = scmp.eq.s32.totalorder %s13, 0
      %p82 = por %p80, %p81
      %p83 = scmp.le.s32.totalorder 1, %s7
      %p84 = scmp.lt.s32.totalorder %s7, 4
      %p85 = pnand %p83, %p84
      %p86 = pneg %p85
      // Predicated region
      $region9: #{_lambda_.1} parent=5 // pred_check
        _
      $region10: #{_lambda_.1} parent=5 // pred_check_branch
        %88 = sbr.rel (%p85) target = $region12
      $region11: #{_lambda_.1} parent=5 // pred_region
        %s89 = ssub.s32 %s7, 1
      $region12: #{_lambda_.1} parent=5 // pred_fallthru
        _
      %p90 = scmp.lt.s32.totalorder %s7, 3
      // Predicated region
      $region13: #{_lambda_.1} parent=5 // pred_check
        %p91 = pneg %p90
      $region14: #{_lambda_.1} parent=5 // pred_check_branch
        %93 = sbr.rel (%p91) target = $region16
      $region15: #{_lambda_.1} parent=5 // pred_region
        // Predicated region
        $region17: #{_lambda_.1} parent=15 // pred_check
          %p94 = pneg %p41
        $region18: #{_lambda_.1} parent=15 // pred_check_branch
          %96 = sbr.rel (%p94) target = $region20
        $region19: #{_lambda_.1} parent=15 // pred_region
          %s97 = sand.u32 %s31, 1
          %s98 = sand.u32 %s31, 1
          %s99 = smul.addr %s98, 16
          %s100 = scalar_lea.vmem [#allocation2], %s99
          %s101 = smul.u32 2, %s14
          %s102 = smul.addr %s15, 2
          %s103 = smul.addr %s101, 6
          %s104 = sadd.s32 %s102, %s103
          %s105 = smul.addr %s104, 4
          %s106 = scalar_lea.vmem %s0, %s105
          // Predicated region
          $region21: #{_lambda_.1} parent=19 // pred_check
            _
          $region22: #{_lambda_.1} parent=19 // pred_check_branch
            %108 = sbr.rel (0) target = $region24
          $region23: #{_lambda_.1} parent=19 // pred_region
            // Predicated region
            $region25: #{_lambda_.1} parent=23 // pred_check
              _
            $region26: #{_lambda_.1} parent=23 // pred_check_branch
              %110 = sbr.rel (0) target = $region28
            $region27: #{_lambda_.1} parent=23 // pred_region
              // Predicated region
              $region40: #{_lambda_.1} parent=27 // pred_check
                _
              $region41: #{_lambda_.1} parent=27 // pred_check_branch
                %127 = sbr.rel (0) target = $region43
              $region42: #{_lambda_.1} parent=27 // pred_region
                loop: start=0, step=1, limit=1
                $region44: #{_lambda_.1} parent=42 // loop_pre_header
                  _
                $region45: #{_lambda_.1} parent=42 // loop_header
                  %s129 = sphi 0, %s133
                  %p130 = scmp.ge.s32.totalorder %s129, 1
                  %s134 = sphi %s106, %s106
                  %s135 = sphi %s100, %s100
                $region46: #{_lambda_.1} parent=42 // loop_header_branch
                  %132 = sbr.rel (%p130) target = $region50
                $region47: #{_lambda_.1} parent=42 // loop_body
                  %v136 = vld [vmem:[%s134] sm:$0xff]
                  %137 = vst [vmem:[%s135] sm:$0xff] %v136
                  %v138 = vld [vmem:[%s134 + $0x18] sm:$0xff]
                  %139 = vst [vmem:[%s135 + $0x8] sm:$0xff] %v138
                $region48: #{_lambda_.1} parent=42 // loop_footer
                  %s133 = sadd.s32 1, %s129
                $region49: #{_lambda_.1} parent=42 // loop_footer_branch
                  %128 = sbr.rel target = $region45
                $region50: #{_lambda_.1} parent=42 // loop_exit
                  _
              $region43: #{_lambda_.1} parent=27 // pred_fallthru
                _
              // Predicated region
              $region51: #{_lambda_.1} parent=27 // pred_check
                _
              $region52: #{_lambda_.1} parent=27 // pred_check_branch
                %141 = sbr.rel target = $region54
              $region53: #{_lambda_.1} parent=27 // pred_region
                _
              $region54: #{_lambda_.1} parent=27 // pred_fallthru
                _
            $region28: #{_lambda_.1} parent=23 // pred_fallthru
              _
            // Predicated region
            $region29: #{_lambda_.1} parent=23 // pred_check
              _
            $region30: #{_lambda_.1} parent=23 // pred_check_branch
              %112 = sbr.rel target = $region32
            $region31: #{_lambda_.1} parent=23 // pred_region
              loop: start=0, step=1, limit=1
              $region33: #{_lambda_.1} parent=31 // loop_pre_header
                _
              $region34: #{_lambda_.1} parent=31 // loop_header
                %s115 = sphi 0, %s119
                %p116 = scmp.ge.s32.totalorder %s115, 1
                %s120 = sphi %s106, %s106
                %s121 = sphi %s100, %s100
              $region35: #{_lambda_.1} parent=31 // loop_header_branch
                %118 = sbr.rel (%p116) target = $region39
              $region36: #{_lambda_.1} parent=31 // loop_body
                %v122 = vld [vmem:[%s120] sm:$0xff]
                %123 = vst [vmem:[%s121] sm:$0xff] %v122
                %v124 = vld [vmem:[%s120 + $0x18] sm:$0xff]
                %125 = vst [vmem:[%s121 + $0x8] sm:$0xff] %v124
              $region37: #{_lambda_.1} parent=31 // loop_footer
                %s119 = sadd.s32 1, %s115
              $region38: #{_lambda_.1} parent=31 // loop_footer_branch
                %114 = sbr.rel target = $region34
              $region39: #{_lambda_.1} parent=31 // loop_exit
                _
            $region32: #{_lambda_.1} parent=23 // pred_fallthru
              _
          $region24: #{_lambda_.1} parent=19 // pred_fallthru
            _
          %142 = vnop
        $region20: #{_lambda_.1} parent=15 // pred_fallthru
          _
      $region16: #{_lambda_.1} parent=5 // pred_fallthru
        _
      %p143 = scmp.le.s32.totalorder 1, %s7
      %p144 = scmp.lt.s32.totalorder %s7, 4
      %p145 = pnand %p143, %p144
      %p146 = pneg %p145
      // Predicated region
      $region55: #{_lambda_.1} parent=5 // pred_check
        _
      $region56: #{_lambda_.1} parent=5 // pred_check_branch
        %148 = sbr.rel (%p145) target = $region58
      $region57: #{_lambda_.1} parent=5 // pred_region
        %s149 = ssub.s32 %s7, 1
        %s150 = sand.u32 %s34, 1
        %s151 = sand.u32 %s34, 1
        %s152 = smul.addr %s151, 16
        %s153 = scalar_lea.vmem [#allocation2], %s152
        // Predicated region
        $region59: #{_lambda_.1} parent=57 // pred_check
          %p154 = pneg %p47
        $region60: #{_lambda_.1} parent=57 // pred_check_branch
          %156 = sbr.rel (%p154) target = $region62
        $region61: #{_lambda_.1} parent=57 // pred_region
          _
        $region62: #{_lambda_.1} parent=57 // pred_fallthru
          _
        %s157 = sand.u32 %s34, 1
        %s158 = sand.u32 %s34, 1
        %s159 = smul.addr %s158, 16
        %s160 = scalar_lea.vmem [#allocation2], %s159
        %p161 = pneg %p47
        %p162 = pneg %p44
        %p163 = pneg %p75
        %p164 = pneg %p72
        %s165 = sand.u32 %s62, 1
        %s166 = sand.u32 %s62, 1
        %s167 = smul.addr %s166, 16
        %s168 = scalar_lea.vmem [#allocation3], %s167
        %s169 = smul.u32 2, %s16
        %s170 = smul.u32 2, %s16
        %s171 = smul.u32 2, %s17
        %v172 = vld [vmem:[%s153] sm:$0xff]
        %v173 = vld [vmem:[%s153 + $0x8] sm:$0xff]
        %174 = vst [vmem:[%s168] sm:$0xff] %v172
        %175 = vst [vmem:[%s168 + $0x8] sm:$0xff] %v173
        %s176 = sand.u32 %s62, 1
        %s177 = sand.u32 %s62, 1
        %s178 = smul.addr %s177, 16
        %s179 = scalar_lea.vmem [#allocation3], %s178
        // Predicated region
        $region63: #{_lambda_.1} parent=57 // pred_check
          %p180 = pneg %p72
        $region64: #{_lambda_.1} parent=57 // pred_check_branch
          %182 = sbr.rel (%p180) target = $region66
        $region65: #{_lambda_.1} parent=57 // pred_region
          %s183 = smul.u32 2, %s16
          %s184 = smul.u32 2, %s17
          %s185 = smul.addr %s183, 6
          %s186 = sadd.s32 %s184, %s185
          %s187 = smul.addr %s186, 4
          %s188 = scalar_lea.vmem %s1, %s187
          // Predicated region
          $region67: #{_lambda_.1} parent=65 // pred_check
            _
          $region68: #{_lambda_.1} parent=65 // pred_check_branch
            %190 = sbr.rel (0) target = $region70
          $region69: #{_lambda_.1} parent=65 // pred_region
            // Predicated region
            $region71: #{_lambda_.1} parent=69 // pred_check
              _
            $region72: #{_lambda_.1} parent=69 // pred_check_branch
              %192 = sbr.rel (0) target = $region74
            $region73: #{_lambda_.1} parent=69 // pred_region
              // Predicated region
              $region86: #{_lambda_.1} parent=73 // pred_check
                _
              $region87: #{_lambda_.1} parent=73 // pred_check_branch
                %209 = sbr.rel (0) target = $region89
              $region88: #{_lambda_.1} parent=73 // pred_region
                loop: start=0, step=1, limit=1
                $region90: #{_lambda_.1} parent=88 // loop_pre_header
                  _
                $region91: #{_lambda_.1} parent=88 // loop_header
                  %s211 = sphi 0, %s215
                  %p212 = scmp.ge.s32.totalorder %s211, 1
                  %s216 = sphi %s179, %s179
                  %s217 = sphi %s188, %s188
                $region92: #{_lambda_.1} parent=88 // loop_header_branch
                  %214 = sbr.rel (%p212) target = $region96
                $region93: #{_lambda_.1} parent=88 // loop_body
                  %v218 = vld [vmem:[%s216] sm:$0xff]
                  %219 = vst [vmem:[%s217] sm:$0xff] %v218
                  %v220 = vld [vmem:[%s216 + $0x8] sm:$0xff]
                  %221 = vst [vmem:[%s217 + $0x18] sm:$0xff] %v220
                $region94: #{_lambda_.1} parent=88 // loop_footer
                  %s215 = sadd.s32 1, %s211
                $region95: #{_lambda_.1} parent=88 // loop_footer_branch
                  %210 = sbr.rel target = $region91
                $region96: #{_lambda_.1} parent=88 // loop_exit
                  _
              $region89: #{_lambda_.1} parent=73 // pred_fallthru
                _
              // Predicated region
              $region97: #{_lambda_.1} parent=73 // pred_check
                _
              $region98: #{_lambda_.1} parent=73 // pred_check_branch
                %223 = sbr.rel target = $region100
              $region99: #{_lambda_.1} parent=73 // pred_region
                _
              $region100: #{_lambda_.1} parent=73 // pred_fallthru
                _
            $region74: #{_lambda_.1} parent=69 // pred_fallthru
              _
            // Predicated region
            $region75: #{_lambda_.1} parent=69 // pred_check
              _
            $region76: #{_lambda_.1} parent=69 // pred_check_branch
              %194 = sbr.rel target = $region78
            $region77: #{_lambda_.1} parent=69 // pred_region
              loop: start=0, step=1, limit=1
              $region79: #{_lambda_.1} parent=77 // loop_pre_header
                _
              $region80: #{_lambda_.1} parent=77 // loop_header
                %s197 = sphi 0, %s201
                %p198 = scmp.ge.s32.totalorder %s197, 1
                %s202 = sphi %s179, %s179
                %s203 = sphi %s188, %s188
              $region81: #{_lambda_.1} parent=77 // loop_header_branch
                %200 = sbr.rel (%p198) target = $region85
              $region82: #{_lambda_.1} parent=77 // loop_body
                %v204 = vld [vmem:[%s202] sm:$0xff]
                %205 = vst [vmem:[%s203] sm:$0xff] %v204
                %v206 = vld [vmem:[%s202 + $0x8] sm:$0xff]
                %207 = vst [vmem:[%s203 + $0x18] sm:$0xff] %v206
              $region83: #{_lambda_.1} parent=77 // loop_footer
                %s201 = sadd.s32 1, %s197
              $region84: #{_lambda_.1} parent=77 // loop_footer_branch
                %196 = sbr.rel target = $region80
              $region85: #{_lambda_.1} parent=77 // loop_exit
                _
            $region78: #{_lambda_.1} parent=69 // pred_fallthru
              _
          $region70: #{_lambda_.1} parent=65 // pred_fallthru
            _
          %224 = vnop
        $region66: #{_lambda_.1} parent=57 // pred_fallthru
          _
      $region58: #{_lambda_.1} parent=5 // pred_fallthru
        _
      %p225 = scmp.le.s32.totalorder 2, %s7
      // Predicated region
      $region101: #{_lambda_.1} parent=5 // pred_check
        %p226 = pneg %p225
      $region102: #{_lambda_.1} parent=5 // pred_check_branch
        %228 = sbr.rel (%p226) target = $region104
      $region103: #{_lambda_.1} parent=5 // pred_region
        %s229 = ssub.s32 %s7, 2
        // Predicated region
        $region105: #{_lambda_.1} parent=103 // pred_check
          %p230 = pneg %p78
        $region106: #{_lambda_.1} parent=103 // pred_check_branch
          %232 = sbr.rel (%p230) target = $region108
        $region107: #{_lambda_.1} parent=103 // pred_region
          %s233 = sand.u32 %s63, 1
          %s234 = sand.u32 %s63, 1
          %s235 = smul.addr %s234, 16
          %s236 = scalar_lea.vmem [#allocation3], %s235
        $region108: #{_lambda_.1} parent=103 // pred_fallthru
          _
      $region104: #{_lambda_.1} parent=5 // pred_fallthru
        _
    $region6: #{_lambda_.1} parent=1 // loop_footer
      %s11 = sadd.s32 1, %s7
    $region7: #{_lambda_.1} parent=1 // loop_footer_branch
      %6 = sbr.rel target = $region3
    $region8: #{_lambda_.1} parent=1 // loop_exit
      _

</llo_original>
